<compile_context>
chip_gen: v6e
topology: v6e:2x2x1
jax: 0.10.0
libtpu: 0.0.40
codegen_flags: <defaults>
</compile_context>

<pallas_src>
import functools

import jax
import jax.numpy as jnp
from jax.experimental import pallas as pl
from jax.experimental.pallas import tpu as pltpu

_LANE = 128
_TARGET_BLOCK_BYTES = 2 * 1024 * 1024  # per output block (before 2x dbl-buffer)


def _addcoords2d_kernel(x_ref, o_ref, *, C, H, W, with_r, extra):
    # x_ref: (BB, C, THW)   o_ref: (BB, C + extra, THW)
    BB = o_ref.shape[0]
    THW = o_ref.shape[2]
    out_dtype = o_ref.dtype

    # Pass-through of the input channels: one full-block store.
    o_ref[:, 0:C, :] = x_ref[...]

    if H == 1 and W == 1:
        # PyTorch special case: coords are all-zero when spatial dims are 1x1.
        xx = jnp.zeros((BB, 1, THW), dtype=jnp.float32)
        yy = jnp.zeros((BB, 1, THW), dtype=jnp.float32)
    else:
        base = pl.program_id(1) * THW  # global flat offset of this spatial tile
        flat = jax.lax.broadcasted_iota(jnp.int32, (1, 1, THW), 2) + base
        if (W & (W - 1)) == 0:  # W is a power of two: shift/mask, no int div
            shift = W.bit_length() - 1
            row = flat >> shift
            col = flat & (W - 1)
        else:
            row = flat // W
            col = flat - row * W
        # Compile-time reciprocal multiplies.  If exactly one of H/W is 1 the
        # PyTorch module divides by zero (0/0 -> NaN); mirror that with NaN.
        sx = (2.0 / (H - 1)) if H > 1 else float("nan")
        sy = (2.0 / (W - 1)) if W > 1 else float("nan")
        xx = row.astype(jnp.float32) * sx - 1.0
        yy = col.astype(jnp.float32) * sy - 1.0
        xx = jnp.broadcast_to(xx, (BB, 1, THW))
        yy = jnp.broadcast_to(yy, (BB, 1, THW))

    coords = [xx, yy]
    if with_r:
        coords.append(jnp.sqrt((xx - 0.5) ** 2 + (yy - 0.5) ** 2))
    # Single store for the 2 (or 3) coordinate channels.
    o_ref[:, C:C + extra, :] = jnp.concatenate(coords, axis=1).astype(out_dtype)


def _pick_hw_tile(HW, cap_elems):
    """Pick the spatial tile: either the full H*W or a 128-multiple <= cap.

    Prefers a tile that evenly divides H*W (no masked ragged edge)."""
    if HW <= cap_elems:
        return HW
    cap = max(_LANE, (cap_elems // _LANE) * _LANE)
    for t in range(cap, _LANE - 1, -_LANE):
        if HW % t == 0:
            return t
    return cap  # ragged last tile; Pallas masks the out-of-bounds writes


def add_coords_2d(x, with_r: bool = False,
                  target_block_bytes: int = _TARGET_BLOCK_BYTES):
    """AddCoords(rank=2) forward.  x: (B, C, H, W) float array (NCHW)."""
    B, C, H, W = x.shape
    extra = 3 if with_r else 2
    C_out = C + extra
    HW = H * W
    itemsize = jnp.dtype(x.dtype).itemsize

    # Spatial tile (lane-dense), then batch tile to amortize per-step overhead
    # for small feature maps.  Keeps 2*(in_block + out_block) well under the
    # scoped-VMEM defaults on v5e (16 MiB) / v6e (32 MiB) / v7x (32 MiB).
    cap_elems = max(_LANE, target_block_bytes // (C_out * itemsize))
    THW = _pick_hw_tile(HW, cap_elems)
    BB = int(min(B, max(1, target_block_bytes // (C_out * THW * itemsize))))
    nB = pl.cdiv(B, BB)
    nT = pl.cdiv(HW, THW)

    x_flat = x.reshape(B, C, HW)

    kernel = functools.partial(_addcoords2d_kernel, C=C, H=H, W=W,
                               with_r=with_r, extra=extra)

    out_flat = pl.pallas_call(
        kernel,
        out_shape=jax.ShapeDtypeStruct((B, C_out, HW), x.dtype),
        grid=(nB, nT),
        in_specs=[pl.BlockSpec((BB, C, THW), lambda b, t: (b, 0, t))],
        out_specs=pl.BlockSpec((BB, C_out, THW), lambda b, t: (b, 0, t)),
        compiler_params=pltpu.CompilerParams(
            dimension_semantics=("parallel", "parallel")),
    )(x_flat)

    return out_flat.reshape(B, C_out, H, W)


def _add_coords_2d_ref(x, with_r: bool = False):
    """Pure-JAX reference mirroring the PyTorch rank==2 forward."""
    B, C, H, W = x.shape
    if H == 1 and W == 1:
        xx = jnp.zeros((B, 1, 1, 1), dtype=x.dtype)
        yy = jnp.zeros((B, 1, 1, 1), dtype=x.dtype)
    else:
        row = jnp.arange(H, dtype=jnp.float32)[:, None]  # varies along H
        col = jnp.arange(W, dtype=jnp.float32)[None, :]  # varies along W
        xx = (row / (H - 1)) * 2.0 - 1.0
        yy = (col / (W - 1)) * 2.0 - 1.0
        xx = jnp.broadcast_to(xx, (H, W))[None, None].repeat(B, axis=0)
        yy = jnp.broadcast_to(yy, (H, W))[None, None].repeat(B, axis=0)
        xx = xx.astype(x.dtype)
        yy = yy.astype(x.dtype)
    out = jnp.concatenate([x, xx, yy], axis=1)
    if with_r:
        rr = jnp.sqrt((xx - 0.5) ** 2 + (yy - 0.5) ** 2)
        out = jnp.concatenate([out, rr], axis=1)
    return out


if __name__ == "__main__":
    key = jax.random.PRNGKey(0)
    B, C, H, W = 2, 4, 16, 16
    x = jax.random.normal(key, (B, C, H, W), dtype=jnp.float32)

    for with_r in (False, True):
        out = add_coords_2d(x, with_r=with_r)
        out = jax.block_until_ready(out)
        ref = _add_coords_2d_ref(x, with_r=with_r)
        assert out.shape == ref.shape, (out.shape, ref.shape)
        assert jnp.allclose(out, ref, atol=1e-5, rtol=1e-5), "mismatch vs reference"

    print("KERNEL_OK")
</pallas_src>

<mosaic_0001>
module attributes {stable_mosaic.version = 11 : i64} {
  func.func @_addcoords2d_kernel(%arg0: i32, %arg1: i32, %arg2: memref<2x4x256xf32, #tpu.memory_space<vmem>>, %arg3: memref<2x6x256xf32, #tpu.memory_space<vmem>>) attributes {dimension_semantics = [#tpu.dimension_semantics<parallel>, #tpu.dimension_semantics<parallel>], iteration_bounds = array<i64: 1, 1>, scalar_prefetch = 0 : i64, scratch_operands = 0 : i64, tpu.core_type = #tpu.core_type<tc>, window_params = [{transform_indices = @transform_0, window_bounds = array<i64: 2, 4, 256>}, {transform_indices = @transform_1, window_bounds = array<i64: 2, 6, 256>}]} {
    %c0 = arith.constant 0 : index
    %c0_0 = arith.constant 0 : index
    %c0_1 = arith.constant 0 : index
    %0 = vector.load %arg2[%c0, %c0_0, %c0_1] : memref<2x4x256xf32, #tpu.memory_space<vmem>>, vector<2x4x256xf32>
    %c0_2 = arith.constant 0 : index
    %c0_3 = arith.constant 0 : index
    %c0_4 = arith.constant 0 : index
    %1 = vector.load %arg3[%c0_2, %c0_3, %c0_4] : memref<2x6x256xf32, #tpu.memory_space<vmem>>, vector<2x4x256xf32>
    tpu.vector_store %arg3[%c0_2, %c0_3, %c0_4], %0 {strides = array<i32>} : memref<2x6x256xf32, #tpu.memory_space<vmem>>, vector<2x4x256xf32>,
    %c256_i32 = arith.constant 256 : i32
    %2 = arith.muli %arg1, %c256_i32 : i32
    %3 = tpu.iota {dimensions = array<i32: 2>} : vector<1x1x256xi32>
    %4 = vector.broadcast %2 : i32 to vector<1x1x256xi32>
    %5 = arith.addi %3, %4 : vector<1x1x256xi32>
    %c4_i32 = arith.constant 4 : i32
    %6 = vector.broadcast %c4_i32 : i32 to vector<1x1x256xi32>
    %7 = arith.shrsi %5, %6 : vector<1x1x256xi32>
    %c15_i32 = arith.constant 15 : i32
    %8 = vector.broadcast %c15_i32 : i32 to vector<1x1x256xi32>
    %9 = arith.andi %5, %8 : vector<1x1x256xi32>
    %10 = arith.sitofp %7 : vector<1x1x256xi32> to vector<1x1x256xf32>
    %cst = arith.constant 0.13333334 : f32
    %11 = vector.broadcast %cst : f32 to vector<1x1x256xf32>
    %12 = arith.mulf %10, %11 : vector<1x1x256xf32>
    %cst_5 = arith.constant 1.000000e+00 : f32
    %13 = vector.broadcast %cst_5 : f32 to vector<1x1x256xf32>
    %14 = arith.subf %12, %13 : vector<1x1x256xf32>
    %15 = arith.sitofp %9 : vector<1x1x256xi32> to vector<1x1x256xf32>
    %cst_6 = arith.constant 0.13333334 : f32
    %16 = vector.broadcast %cst_6 : f32 to vector<1x1x256xf32>
    %17 = arith.mulf %15, %16 : vector<1x1x256xf32>
    %cst_7 = arith.constant 1.000000e+00 : f32
    %18 = vector.broadcast %cst_7 : f32 to vector<1x1x256xf32>
    %19 = arith.subf %17, %18 : vector<1x1x256xf32>
    %20 = vector.shape_cast %14 : vector<1x1x256xf32> to vector<1x1x256xf32>
    %21 = vector.broadcast %20 : vector<1x1x256xf32> to vector<2x1x256xf32>
    %22 = vector.shape_cast %19 : vector<1x1x256xf32> to vector<1x1x256xf32>
    %23 = vector.broadcast %22 : vector<1x1x256xf32> to vector<2x1x256xf32>
    %24 = tpu.concatenate %21, %23 in 1 : vector<2x1x256xf32>, vector<2x1x256xf32> -> vector<2x2x256xf32>
    %c0_8 = arith.constant 0 : index
    %c4 = arith.constant 4 : index
    %c0_9 = arith.constant 0 : index
    %25 = vector.load %arg3[%c0_8, %c4, %c0_9] : memref<2x6x256xf32, #tpu.memory_space<vmem>>, vector<2x2x256xf32>
    tpu.vector_store %arg3[%c0_8, %c4, %c0_9], %24 {strides = array<i32>} : memref<2x6x256xf32, #tpu.memory_space<vmem>>, vector<2x2x256xf32>,
    return
  }
  func.func @transform_0(%arg0: i32, %arg1: i32) -> (i32, i32, i32) {
    %c0_i32 = arith.constant 0 : i32
    %c0_i32_0 = arith.constant 0 : i32
    return %arg0, %c0_i32, %arg1 : i32, i32, i32
  }
  func.func @transform_1(%arg0: i32, %arg1: i32) -> (i32, i32, i32) {
    %c0_i32 = arith.constant 0 : i32
    %c0_i32_0 = arith.constant 0 : i32
    return %arg0, %c0_i32, %arg1 : i32, i32, i32
  }
}

</mosaic_0001>

<llo_original>
// kernel: tpu_custom_call.1
$region0: #{tpu_custom_call.1}
  #allocation0 [shape = 'u32[]', space=smem, size = 0x4, offset = 0x4, fixed_abs, tag = 'smem constant byte address 0x4 - core index']
  #allocation1 [shape = 'u32[144,128]{1,0:T(1,128)}', space=vmem, size = 0x12000, scoped, tag = 'internal scratch']
  %s0 = inlined_call_operand.hbm [shape: f32[2,4,256], index: 0, kind: input, shape index: {}]
  %s1 = inlined_call_operand.vmem [shape: f32[2,6,256], index: 1, kind: output, shape index: {}]
  %s2 = sld [smem:[#allocation0]]
  $region18: #{tpu_custom_call.1} parent=0
    _
  %s4 = ssub.s32 1, %s2
  %s5 = scalar_select 0, %s4, %s2
  $region1: #{tpu_custom_call.1} parent=0
    #allocation2 [shape = 'u8[8192]{0}', space=vmem, size = 0x2000, scoped, tag = 'input window, operand 0, single buffered']
    #allocation3 [shape = 's32[1]{0}', space=sflag, size = 0x4, scoped, tag = 'scoped memory for tpu_custom_call.1']
    %6 = vsyncpa [#allocation3], 0
    // Predicated region
    $region2: #{tpu_custom_call.1} parent=1 // pred_check
      _
    $region3: #{tpu_custom_call.1} parent=1 // pred_check_branch
      %8 = sbr.rel (0) target = $region5
    $region4: #{tpu_custom_call.1} parent=1 // pred_region
      %s10 = ssub.s32 256, 256
      %11 = vsyncadd [#allocation3], %s10
      %s12 = sshll.u32 [#allocation2], 4
      %s13 = int_to_ptr.vmem [resolvable:$true] %s12
      %18 = dma.hbm_to_vmem [thread:$0]  %s0, 256, %s13, [#allocation3], 128, 128, 8
    $region5: #{tpu_custom_call.1} parent=1 // pred_fallthru
      _
    // Predicated region
    $region6: #{tpu_custom_call.1} parent=1 // pred_check
      _
    $region7: #{tpu_custom_call.1} parent=1 // pred_check_branch
      %20 = sbr.rel (0) target = $region9
    $region8: #{tpu_custom_call.1} parent=1 // pred_region
      %21 = dma.done [#allocation3], 256
    $region9: #{tpu_custom_call.1} parent=1 // pred_fallthru
      _
    %v22 = vld [vmem:[#allocation2] sm:$0xff]
    %v23 = vld [vmem:[#allocation2 + $0x8] sm:$0xff]
    %v26 = vcombine.high %v22, %v22
    %v27 = vcombine.high %v23, %v23
    %30 = vst [vmem:[%s1] sm:$0xf] %v22
    %31 = vst [vmem:[%s1 + $0x8] sm:$0xf] %v26
    %32 = vst [vmem:[%s1 + $0x10] sm:$0xf] %v23
    %33 = vst [vmem:[%s1 + $0x18] sm:$0xf] %v27
    %s34 = smul.u32 0, 256
    %v35 = vlaneseq
    %v36 = vand.u32 %v35, 127
    %v37 = vadd.s32 %v36, 128
    %v38 = vstv %s34
    %v39 = vadd.s32 %v36, %v38
    %v40 = vadd.s32 %v37, %v38
    %v41 = vshra.s32 %v39, 4
    %v42 = vshra.s32 %v40, 4
    %v43 = vand.u32 %v39, 15
    %v44 = vand.u32 %v40, 15
    %v45 = vcvt.s32.f32 %v41
    %v46 = vcvt.s32.f32 %v42
    %v47 = vmul.f32 %v45, 0.13333334
    %v48 = vmul.f32 %v46, 0.13333334
    %v49 = vsub.f32 %v47, 1.0
    %v50 = vsub.f32 %v48, 1.0
    %v51 = vcvt.s32.f32 %v43
    %v52 = vcvt.s32.f32 %v44
    %v53 = vmul.f32 %v51, 0.13333334
    %v54 = vmul.f32 %v52, 0.13333334
    %v55 = vsub.f32 %v53, 1.0
    %v56 = vsub.f32 %v54, 1.0
    %vm57 = vcmask 1040384
    %v58 = vsel %vm57, %v49, %v55
    %v59 = vsel %vm57, %v50, %v56
    %v62 = vrot.slane %v58, 4
    %v63 = vrot.slane %v59, 4
    %66 = vst [vmem:[%s1] sm:$0x30] %v62
    %67 = vst [vmem:[%s1 + $0x8] sm:$0x30] %v63
    %68 = vst [vmem:[%s1 + $0x10] sm:$0x30] %v62
    %69 = vst [vmem:[%s1 + $0x18] sm:$0x30] %v63
    // Predicated region
    $region10: #{tpu_custom_call.1} parent=1 // pred_check
      _
    $region11: #{tpu_custom_call.1} parent=1 // pred_check_branch
      %71 = sbr.rel (0) target = $region13
    $region12: #{tpu_custom_call.1} parent=1 // pred_region
      _
    $region13: #{tpu_custom_call.1} parent=1 // pred_fallthru
      _
    // Predicated region
    $region14: #{tpu_custom_call.1} parent=1 // pred_check
      _
    $region15: #{tpu_custom_call.1} parent=1 // pred_check_branch
      %73 = sbr.rel (0) target = $region17
    $region16: #{tpu_custom_call.1} parent=1 // pred_region
      _
    $region17: #{tpu_custom_call.1} parent=1 // pred_fallthru
      _
    %74 = vsyncpa [#allocation3], 1

</llo_original>
